<compile_context>
chip_gen: v7x
topology: tpu7x:2x2x1
jax: 0.10.0
libtpu: 0.0.40
codegen_flags: <defaults>
</compile_context>

<pallas_src>
import functools

import jax
import jax.numpy as jnp
from jax.experimental import pallas as pl
from jax.experimental.pallas import tpu as pltpu


# Max tile sizes; comfortably within v5e/v6e/v7x scoped VMEM with double
# buffering: 2*(tm*tk + tk*tn + tm*tn)*4B + acc ~= 4.5 MiB at the maxima.
_MAX_TM = 256
_MAX_TN = 512
_MAX_TK = 512


def _round_up(x: int, m: int) -> int:
    return ((x + m - 1) // m) * m


def _make_matmul_bias_kernel(red_axis: int):
    """Tiled matmul with bias folded into the accumulator init.

    Kernel refs (leading size-1 ensemble dim squeezed away by the BlockSpecs):
      x (tm, tk), w (tk, tn), b (1, tn), o (tm, tn), acc (tm, tn) f32 scratch.
    """

    def kernel(x_ref, w_ref, b_ref, o_ref, acc_ref):
        k = pl.program_id(red_axis)

        @pl.when(k == 0)
        def _():
            acc_ref[...] = jnp.broadcast_to(
                b_ref[...].astype(jnp.float32), acc_ref.shape
            )

        acc_ref[...] += jnp.dot(
            x_ref[...], w_ref[...], preferred_element_type=jnp.float32
        )

        @pl.when(k == pl.num_programs(red_axis) - 1)
        def _():
            o_ref[...] = acc_ref[...].astype(o_ref.dtype)

    return kernel


def _cost(flops: int, *arrays, out_elems: int, out_dtype) -> pl.CostEstimate:
    nbytes = sum(int(a.size) * a.dtype.itemsize for a in arrays)
    nbytes += out_elems * jnp.dtype(out_dtype).itemsize
    return pl.CostEstimate(flops=flops, transcendentals=0, bytes_accessed=nbytes)


def _shared_x_forward(x, weight, bias, out_dtype):
    """x: (N, J) shared across the ensemble -> one fused (N, J) x (J, E*K) matmul."""
    E, J, K = weight.shape
    N = x.shape[0]
    EK = E * K

    # Fold ensemble into the lane (output) dim: columns ordered e*K + k_out.
    w_f = jnp.transpose(weight, (1, 0, 2)).reshape(J, EK)
    b_f = bias.reshape(1, EK)

    tm = min(_MAX_TM, _round_up(N, 8))
    tn = min(_MAX_TN, _round_up(EK, 128))
    tk = min(_MAX_TK, _round_up(J, 128))
    Mp, Np, Kp = _round_up(N, tm), _round_up(EK, tn), _round_up(J, tk)

    x_p = jnp.pad(x, ((0, Mp - N), (0, Kp - J)))
    w_p = jnp.pad(w_f, ((0, Kp - J), (0, Np - EK)))
    b_p = jnp.pad(b_f, ((0, 0), (0, Np - EK)))

    grid = (Mp // tm, Np // tn, Kp // tk)
    out_p = pl.pallas_call(
        _make_matmul_bias_kernel(red_axis=2),
        out_shape=jax.ShapeDtypeStruct((Mp, Np), out_dtype),
        grid_spec=pltpu.PrefetchScalarGridSpec(
            num_scalar_prefetch=0,
            grid=grid,
            in_specs=[
                pl.BlockSpec((tm, tk), lambda m, n, k: (m, k)),
                pl.BlockSpec((tk, tn), lambda m, n, k: (k, n)),
                pl.BlockSpec((1, tn), lambda m, n, k: (0, n)),
            ],
            out_specs=pl.BlockSpec((tm, tn), lambda m, n, k: (m, n)),
            scratch_shapes=[pltpu.VMEM((tm, tn), jnp.float32)],
        ),
        compiler_params=pltpu.CompilerParams(
            dimension_semantics=("parallel", "parallel", "arbitrary"),
            vmem_limit_bytes=32 * 1024 * 1024,
        ),
        cost_estimate=_cost(
            2 * N * J * EK, x, weight, bias, out_elems=N * EK, out_dtype=out_dtype
        ),
    )(x_p, w_p, b_p)

    out = out_p[:N, :EK]  # strip padding
    return jnp.transpose(out.reshape(N, E, K), (1, 0, 2))


def _per_ensemble_forward(x, weight, bias, out_dtype):
    """x: (E, N, J) -> batched per-member matmul."""
    E, J, K = weight.shape
    N = x.shape[1]

    tm = min(_MAX_TM, _round_up(N, 8))
    tn = min(_MAX_TN, _round_up(K, 128))
    tk = min(_MAX_TK, _round_up(J, 128))
    Mp, Np, Kp = _round_up(N, tm), _round_up(K, tn), _round_up(J, tk)

    x_p = jnp.pad(x, ((0, 0), (0, Mp - N), (0, Kp - J)))
    w_p = jnp.pad(weight, ((0, 0), (0, Kp - J), (0, Np - K)))
    b_p = jnp.pad(bias, ((0, 0), (0, 0), (0, Np - K)))

    # Grid (ensemble, n_out_tiles, m_tiles, k_red_tiles): with a single k tile
    # (common: small input_dim) the weight block index is unchanged across
    # consecutive m steps, so the weight tile stays resident and x streams.
    grid = (E, Np // tn, Mp // tm, Kp // tk)
    out_p = pl.pallas_call(
        _make_matmul_bias_kernel(red_axis=3),
        out_shape=jax.ShapeDtypeStruct((E, Mp, Np), out_dtype),
        grid_spec=pltpu.PrefetchScalarGridSpec(
            num_scalar_prefetch=0,
            grid=grid,
            in_specs=[
                pl.BlockSpec((None, tm, tk), lambda e, n, m, k: (e, m, k)),
                pl.BlockSpec((None, tk, tn), lambda e, n, m, k: (e, k, n)),
                pl.BlockSpec((None, 1, tn), lambda e, n, m, k: (e, 0, n)),
            ],
            out_specs=pl.BlockSpec((None, tm, tn), lambda e, n, m, k: (e, m, n)),
            scratch_shapes=[pltpu.VMEM((tm, tn), jnp.float32)],
        ),
        compiler_params=pltpu.CompilerParams(
            dimension_semantics=("parallel", "parallel", "parallel", "arbitrary"),
            vmem_limit_bytes=32 * 1024 * 1024,
        ),
        cost_estimate=_cost(
            2 * E * N * J * K, x, weight, bias, out_elems=E * N * K, out_dtype=out_dtype
        ),
    )(x_p, w_p, b_p)

    return out_p[:, :N, :K]


def ensemble_linear(x, weight, bias):
    """Pallas implementation of EnsembleLinear.forward.

    x:      (N, input_dim) or (num_ensemble, N, input_dim)
    weight: (num_ensemble, input_dim, output_dim)
    bias:   (num_ensemble, 1, output_dim)
    returns (num_ensemble, N, output_dim)
    """
    E = weight.shape[0]
    out_dtype = jnp.result_type(x.dtype, weight.dtype, bias.dtype)
    if x.ndim == 2:
        return _shared_x_forward(x, weight, bias, out_dtype)
    assert x.ndim == 3 and x.shape[0] == E
    return _per_ensemble_forward(x, weight, bias, out_dtype)


def init_ensemble_linear_params(key, input_dim, output_dim, num_ensemble):
    """Deterministic init mirroring the PyTorch module's __init__."""
    std = 1.0 / (2.0 * (input_dim ** 0.5))
    # TODO(synk): PyTorch trunc_normal_ truncates at absolute [-2, 2]; here the
    # truncation is at +/-2*std (only affects this synthetic init, not the kernel).
    weight = std * jax.random.truncated_normal(
        key, -2.0, 2.0, (num_ensemble, input_dim, output_dim), dtype=jnp.float32
    )
    bias = jnp.zeros((num_ensemble, 1, output_dim), dtype=jnp.float32)
    return weight, bias


if __name__ == "__main__":
    key = jax.random.PRNGKey(0)
    k_w, k_x2, k_x3, k_w2, k_x4, k_x5 = jax.random.split(key, 6)

    # ---- small case (matches module defaults / previous test) ----
    num_ensemble, input_dim, output_dim, n = 4, 32, 16, 8
    weight, bias = init_ensemble_linear_params(k_w, input_dim, output_dim, num_ensemble)

    # Case 1: 2-D shared input ('ij,bjk->bik').
    x2 = jax.random.normal(k_x2, (n, input_dim), dtype=jnp.float32)
    out2 = jax.block_until_ready(ensemble_linear(x2, weight, bias))
    ref2 = jnp.einsum("ij,bjk->bik", x2, weight) + bias
    assert out2.shape == (num_ensemble, n, output_dim)
    assert jnp.allclose(out2, ref2, atol=1e-5, rtol=1e-5)

    # Case 2: 3-D per-ensemble input ('bij,bjk->bik').
    x3 = jax.random.normal(k_x3, (num_ensemble, n, input_dim), dtype=jnp.float32)
    out3 = jax.block_until_ready(ensemble_linear(x3, weight, bias))
    ref3 = jnp.einsum("bij,bjk->bik", x3, weight) + bias
    assert out3.shape == (num_ensemble, n, output_dim)
    assert jnp.allclose(out3, ref3, atol=1e-5, rtol=1e-5)

    # ---- slightly larger, non-aligned case exercising padding and a
    #      multi-tile reduction axis (input_dim > max k tile of 512) ----
    e2, j2, o2, n2 = 3, 640, 96, 20
    weight2, bias2 = init_ensemble_linear_params(k_w2, j2, o2, e2)
    bias2 = bias2 + 0.1 * jax.random.normal(k_w2, bias2.shape, dtype=jnp.float32)

    x4 = jax.random.normal(k_x4, (n2, j2), dtype=jnp.float32)
    out4 = jax.block_until_ready(ensemble_linear(x4, weight2, bias2))
    ref4 = jnp.einsum("ij,bjk->bik", x4, weight2) + bias2
    assert out4.shape == (e2, n2, o2)
    assert jnp.allclose(out4, ref4, atol=2e-3, rtol=2e-3)

    x5 = jax.random.normal(k_x5, (e2, n2, j2), dtype=jnp.float32)
    out5 = jax.block_until_ready(ensemble_linear(x5, weight2, bias2))
    ref5 = jnp.einsum("bij,bjk->bik", x5, weight2) + bias2
    assert out5.shape == (e2, n2, o2)
    assert jnp.allclose(out5, ref5, atol=2e-3, rtol=2e-3)

    print("KERNEL_OK")
</pallas_src>

<mosaic_0001>
module attributes {stable_mosaic.version = 11 : i64} {
  func.func @kernel(%arg0: i32, %arg1: i32, %arg2: i32, %arg3: memref<8x128xf32, #tpu.memory_space<vmem>>, %arg4: memref<128x128xf32, #tpu.memory_space<vmem>>, %arg5: memref<1x128xf32, #tpu.memory_space<vmem>>, %arg6: memref<8x128xf32, #tpu.memory_space<vmem>>, %arg7: memref<8x128xf32, #tpu.memory_space<vmem>>) attributes {dimension_semantics = [#tpu.dimension_semantics<parallel>, #tpu.dimension_semantics<parallel>, #tpu.dimension_semantics<arbitrary>], iteration_bounds = array<i64: 1, 1, 1>, scalar_prefetch = 0 : i64, scratch_operands = 1 : i64, tpu.core_type = #tpu.core_type<tc>, window_params = [{transform_indices = @transform_0, window_bounds = array<i64: 8, 128>}, {transform_indices = @transform_1, window_bounds = array<i64: 128, 128>}, {transform_indices = @transform_2, window_bounds = array<i64: 1, 128>}, {transform_indices = @transform_3, window_bounds = array<i64: 8, 128>}]} {
    %c0_i32 = arith.constant 0 : i32
    %0 = arith.cmpi eq, %arg2, %c0_i32 : i32
    %1 = arith.extui %0 : i1 to i32
    %c0_i32_0 = arith.constant 0 : i32
    %2 = arith.cmpi ne, %1, %c0_i32_0 : i32
    scf.if %2 {
      %c0_10 = arith.constant 0 : index
      %c0_11 = arith.constant 0 : index
      %12 = vector.load %arg5[%c0_10, %c0_11] : memref<1x128xf32, #tpu.memory_space<vmem>>, vector<1x128xf32>
      %13 = vector.shape_cast %12 : vector<1x128xf32> to vector<1x128xf32>
      %14 = vector.broadcast %13 : vector<1x128xf32> to vector<8x128xf32>
      %c0_12 = arith.constant 0 : index
      %c0_13 = arith.constant 0 : index
      %15 = vector.load %arg7[%c0_12, %c0_13] : memref<8x128xf32, #tpu.memory_space<vmem>>, vector<8x128xf32>
      tpu.vector_store %arg7[%c0_12, %c0_13], %14 {strides = array<i32>} : memref<8x128xf32, #tpu.memory_space<vmem>>, vector<8x128xf32>,
    } else {
    }
    %c0 = arith.constant 0 : index
    %c0_1 = arith.constant 0 : index
    %3 = vector.load %arg7[%c0, %c0_1] : memref<8x128xf32, #tpu.memory_space<vmem>>, vector<8x128xf32>
    %c0_2 = arith.constant 0 : index
    %c0_3 = arith.constant 0 : index
    %4 = vector.load %arg3[%c0_2, %c0_3] : memref<8x128xf32, #tpu.memory_space<vmem>>, vector<8x128xf32>
    %c0_4 = arith.constant 0 : index
    %c0_5 = arith.constant 0 : index
    %5 = vector.load %arg4[%c0_4, %c0_5] : memref<128x128xf32, #tpu.memory_space<vmem>>, vector<128x128xf32>
    %cst = arith.constant dense<0.000000e+00> : vector<8x128xf32>
    %6 = tpu.matmul %4, %5, %cst {dimension_numbers = #tpu.dot_dimension_numbers<[1], [0], [0], [1], [0, 0, 1, 1], [], []>} : vector<8x128xf32>, vector<128x128xf32>, vector<8x128xf32> -> vector<8x128xf32>
    %7 = arith.addf %3, %6 : vector<8x128xf32>
    %c0_6 = arith.constant 0 : index
    %c0_7 = arith.constant 0 : index
    %8 = vector.load %arg7[%c0_6, %c0_7] : memref<8x128xf32, #tpu.memory_space<vmem>>, vector<8x128xf32>
    tpu.vector_store %arg7[%c0_6, %c0_7], %7 {strides = array<i32>} : memref<8x128xf32, #tpu.memory_space<vmem>>, vector<8x128xf32>,
    %c0_i32_8 = arith.constant 0 : i32
    %9 = arith.cmpi eq, %arg2, %c0_i32_8 : i32
    %10 = arith.extui %9 : i1 to i32
    %c0_i32_9 = arith.constant 0 : i32
    %11 = arith.cmpi ne, %10, %c0_i32_9 : i32
    scf.if %11 {
      %c0_10 = arith.constant 0 : index
      %c0_11 = arith.constant 0 : index
      %12 = vector.load %arg7[%c0_10, %c0_11] : memref<8x128xf32, #tpu.memory_space<vmem>>, vector<8x128xf32>
      %c0_12 = arith.constant 0 : index
      %c0_13 = arith.constant 0 : index
      %13 = vector.load %arg6[%c0_12, %c0_13] : memref<8x128xf32, #tpu.memory_space<vmem>>, vector<8x128xf32>
      tpu.vector_store %arg6[%c0_12, %c0_13], %12 {strides = array<i32>} : memref<8x128xf32, #tpu.memory_space<vmem>>, vector<8x128xf32>,
    } else {
    }
    return
  }
  func.func @transform_0(%arg0: i32, %arg1: i32, %arg2: i32) -> (i32, i32) {
    %c0_i32 = arith.constant 0 : i32
    return %arg0, %arg2 : i32, i32
  }
  func.func @transform_1(%arg0: i32, %arg1: i32, %arg2: i32) -> (i32, i32) {
    %c0_i32 = arith.constant 0 : i32
    return %arg2, %arg1 : i32, i32
  }
  func.func @transform_2(%arg0: i32, %arg1: i32, %arg2: i32) -> (i32, i32) {
    %c0_i32 = arith.constant 0 : i32
    %c0_i32_0 = arith.constant 0 : i32
    return %c0_i32, %arg1 : i32, i32
  }
  func.func @transform_3(%arg0: i32, %arg1: i32, %arg2: i32) -> (i32, i32) {
    %c0_i32 = arith.constant 0 : i32
    return %arg0, %arg1 : i32, i32
  }
}

</mosaic_0001>

<llo_original>
// kernel: tpu_custom_call.1
$region0: #{tpu_custom_call.1}
  #allocation0 [shape = 'u32[]', space=smem, size = 0x4, offset = 0x4, fixed_abs, tag = 'smem constant byte address 0x4 - core index']
  #allocation1 [shape = 'u32[144,128]{1,0:T(1,128)}', space=vmem, size = 0x12000, scoped, tag = 'internal scratch']
  #allocation2 [shape = 'f32[8,128]{1,0:T(8,128)}', space=vmem, size = 0x1000, scoped, tag = 'scratch operand']
  %s0 = inlined_call_operand.hbm [shape: f32[8,128], index: 0, kind: input, shape index: {}]
  %s1 = inlined_call_operand.hbm [shape: f32[128,128], index: 1, kind: input, shape index: {}]
  %s2 = inlined_call_operand.vmem [shape: f32[1,128], index: 2, kind: input, shape index: {}]
  %s3 = inlined_call_operand.hbm [shape: f32[8,128], index: 3, kind: output, shape index: {}]
  %s4 = sld [smem:[#allocation0]]
  $region38: #{tpu_custom_call.1} parent=0
    _
  %s6 = ssub.s32 1, %s4
  %s7 = scalar_select 0, %s6, %s4
  $region1: #{tpu_custom_call.1} parent=0
    #allocation3 [shape = 'u8[4096]{0}', space=vmem, size = 0x1000, scoped, tag = 'input window, operand 0, single buffered']
    #allocation4 [shape = 's32[1]{0}', space=sflag, size = 0x4, scoped, tag = 'scoped memory for tpu_custom_call.1']
    #allocation5 [shape = 's32[1]{0}', space=sflag, size = 0x4, scoped, tag = 'scoped memory for tpu_custom_call.1']
    #allocation6 [shape = 'u8[65536]{0}', space=vmem, size = 0x10000, scoped, tag = 'input window, operand 1, single buffered']
    #allocation7 [shape = 's32[1]{0}', space=sflag, size = 0x4, scoped, tag = 'scoped memory for tpu_custom_call.1']
    #allocation8 [shape = 'u8[4096]{0}', space=vmem, size = 0x1000, scoped, tag = 'output window, operand 0, single buffered']
    %8 = vsyncpa [#allocation4], 0
    %9 = vsyncpa [#allocation7], 0
    %10 = vsyncpa [#allocation5], 0
    // Predicated region
    $region2: #{tpu_custom_call.1} parent=1 // pred_check
      _
    $region3: #{tpu_custom_call.1} parent=1 // pred_check_branch
      %12 = sbr.rel (0) target = $region5
    $region4: #{tpu_custom_call.1} parent=1 // pred_region
      %s14 = ssub.s32 128, 128
      %15 = vsyncadd [#allocation4], %s14
      %s17 = sshll.u32 [#allocation3], 4
      %s18 = int_to_ptr.vmem [resolvable:$true] %s17
      %20 = dma.hbm_to_vmem [thread:$0]  %s0, 128, %s18, [#allocation4]
    $region5: #{tpu_custom_call.1} parent=1 // pred_fallthru
      _
    // Predicated region
    $region6: #{tpu_custom_call.1} parent=1 // pred_check
      _
    $region7: #{tpu_custom_call.1} parent=1 // pred_check_branch
      %22 = sbr.rel (0) target = $region9
    $region8: #{tpu_custom_call.1} parent=1 // pred_region
      %s24 = ssub.s32 2048, 2048
      %25 = vsyncadd [#allocation7], %s24
      %s26 = sshll.u32 [#allocation6], 4
      %s27 = int_to_ptr.vmem [resolvable:$true] %s26
      %32 = dma.hbm_to_vmem [thread:$0]  %s1, 2048, %s27, [#allocation7], 128, 128, 8
    $region9: #{tpu_custom_call.1} parent=1 // pred_fallthru
      _
    // Predicated region
    $region10: #{tpu_custom_call.1} parent=1 // pred_check
      _
    $region11: #{tpu_custom_call.1} parent=1 // pred_check_branch
      %34 = sbr.rel (0) target = $region13
    $region12: #{tpu_custom_call.1} parent=1 // pred_region
      _
    $region13: #{tpu_custom_call.1} parent=1 // pred_fallthru
      _
    // Predicated region
    $region14: #{tpu_custom_call.1} parent=1 // pred_check
      _
    $region15: #{tpu_custom_call.1} parent=1 // pred_check_branch
      %36 = sbr.rel (0) target = $region17
    $region16: #{tpu_custom_call.1} parent=1 // pred_region
      %37 = dma.done [#allocation4], 128
    $region17: #{tpu_custom_call.1} parent=1 // pred_fallthru
      _
    // Predicated region
    $region18: #{tpu_custom_call.1} parent=1 // pred_check
      _
    $region19: #{tpu_custom_call.1} parent=1 // pred_check_branch
      %39 = sbr.rel (0) target = $region21
    $region20: #{tpu_custom_call.1} parent=1 // pred_region
      %40 = dma.done [#allocation7], 2048
    $region21: #{tpu_custom_call.1} parent=1 // pred_fallthru
      _
    %p41 = scmp.eq.s32.totalorder 0, 0
    // Predicated region
    $region22: #{tpu_custom_call.1} parent=1 // pred_check
      %p42 = pneg %p41
    $region23: #{tpu_custom_call.1} parent=1 // pred_check_branch
      %44 = sbr.rel (%p42) target = $region25
    $region24: #{tpu_custom_call.1} parent=1 // pred_region
      %v45 = vld [vmem:[%s2] sm:$0x1]
      %v47 = vlaneseq
      %v48 = vshrl.u32 %v47, 7
      %v49 = vsub.s32 0, %v48
      %v50 = vrot.slane %v45, %v49
      %52 = vst [vmem:[#allocation2] sm:$0xff] %v50
    $region25: #{tpu_custom_call.1} parent=1 // pred_fallthru
      _
    %v53 = vld [vmem:[#allocation2] sm:$0xff]
    %v54 = vld [vmem:[#allocation3] sm:$0xff]
    %v55 = vld [vmem:[#allocation6] sm:$0xff]
    %v56 = vld [vmem:[#allocation6 + $0x8] sm:$0xff]
    %v57 = vld [vmem:[#allocation6 + $0x10] sm:$0xff]
    %v58 = vld [vmem:[#allocation6 + $0x18] sm:$0xff]
    %v59 = vld [vmem:[#allocation6 + $0x20] sm:$0xff]
    %v60 = vld [vmem:[#allocation6 + $0x28] sm:$0xff]
    %v61 = vld [vmem:[#allocation6 + $0x30] sm:$0xff]
    %v62 = vld [vmem:[#allocation6 + $0x38] sm:$0xff]
    %v63 = vld [vmem:[#allocation6 + $0x40] sm:$0xff]
    %v64 = vld [vmem:[#allocation6 + $0x48] sm:$0xff]
    %v65 = vld [vmem:[#allocation6 + $0x50] sm:$0xff]
    %v66 = vld [vmem:[#allocation6 + $0x58] sm:$0xff]
    %v67 = vld [vmem:[#allocation6 + $0x60] sm:$0xff]
    %v68 = vld [vmem:[#allocation6 + $0x68] sm:$0xff]
    %v69 = vld [vmem:[#allocation6 + $0x70] sm:$0xff]
    %v70 = vld [vmem:[#allocation6 + $0x78] sm:$0xff]
    %71 = vmatprep.subr.mxu0 0.0
    %72 = vmatpush1.msra.mxu0 %v55
    %73 = vmatprep.subr.mxu0 0.0
    %74 = vmatpush1.msra.mxu0 %v56
    %75 = vmatprep.subr.mxu0 0.0
    %76 = vmatpush1.msra.mxu0 %v57
    %77 = vmatprep.subr.mxu0 0.0
    %78 = vmatpush1.msra.mxu0 %v58
    %79 = vmatprep.subr.mxu0 0.0
    %80 = vmatpush1.msra.mxu0 %v59
    %81 = vmatprep.subr.mxu0 0.0
    %82 = vmatpush1.msra.mxu0 %v60
    %83 = vmatprep.subr.mxu0 0.0
    %84 = vmatpush1.msra.mxu0 %v61
    %85 = vmatprep.subr.mxu0 0.0
    %86 = vmatpush1.msra.mxu0 %v62
    %87 = vmatprep.subr.mxu0 0.0
    %88 = vmatpush1.msra.mxu0 %v63
    %89 = vmatprep.subr.mxu0 0.0
    %90 = vmatpush1.msra.mxu0 %v64
    %91 = vmatprep.subr.mxu0 0.0
    %92 = vmatpush1.msra.mxu0 %v65
    %93 = vmatprep.subr.mxu0 0.0
    %94 = vmatpush1.msra.mxu0 %v66
    %95 = vmatprep.subr.mxu0 0.0
    %96 = vmatpush1.msra.mxu0 %v67
    %97 = vmatprep.subr.mxu0 0.0
    %98 = vmatpush1.msra.mxu0 %v68
    %99 = vmatprep.subr.mxu0 0.0
    %100 = vmatpush1.msra.mxu0 %v69
    %101 = vmatprep.subr.mxu0 0.0
    %102 = vmatpush1.msra.mxu0 %v70
    %103 = vmatprep.subr.mxu0 0.0
    %104 = vmatpush1.msra.mxu0 0.0
    %105 = vmatprep.subr.mxu0 0.0
    %106 = vmatpush1.msra.mxu0 0.0
    %107 = vmatprep.subr.mxu0 0.0
    %108 = vmatpush1.msra.mxu0 0.0
    %109 = vmatprep.subr.mxu0 0.0
    %110 = vmatpush1.msra.mxu0 0.0
    %111 = vmatprep.subr.mxu0 0.0
    %112 = vmatpush1.msra.mxu0 0.0
    %113 = vmatprep.subr.mxu0 0.0
    %114 = vmatpush1.msra.mxu0 0.0
    %115 = vmatprep.subr.mxu0 0.0
    %116 = vmatpush1.msra.mxu0 0.0
    %117 = vmatprep.subr.mxu0 0.0
    %118 = vmatpush1.msra.mxu0 0.0
    %119 = vmatprep.subr.mxu0 0.0
    %120 = vmatpush1.msra.mxu0 0.0
    %121 = vmatprep.subr.mxu0 0.0
    %122 = vmatpush1.msra.mxu0 0.0
    %123 = vmatprep.subr.mxu0 0.0
    %124 = vmatpush1.msra.mxu0 0.0
    %125 = vmatprep.subr.mxu0 0.0
    %126 = vmatpush1.msra.mxu0 0.0
    %127 = vmatprep.subr.mxu0 0.0
    %128 = vmatpush1.msra.mxu0 0.0
    %129 = vmatprep.subr.mxu0 0.0
    %130 = vmatpush1.msra.mxu0 0.0
    %131 = vmatprep.subr.mxu0 0.0
    %132 = vmatpush1.msra.mxu0 0.0
    %133 = vmatprep.subr.mxu0 0.0
    %134 = vmatpush1.msra.mxu0 0.0
    %135 = vmatprep.mubr.f32.mxu0 0.0
    %136 = vmatmul.mubr.f32.gmra.mrb[0].mxu0 %v54
    %v137 = vpop.f32.mrb[0].mxu0
    %v138 = vadd.f32 0.0, %v137
    %v139 = vpop.f32.mrb[0].mxu0
    %140 = vdwg.mxu0
    %v141 = vadd.f32 %v53, %v138
    %142 = vst [vmem:[#allocation2] sm:$0xff] %v141
    // Predicated region
    $region26: #{tpu_custom_call.1} parent=1 // pred_check
      %p143 = pneg %p41
    $region27: #{tpu_custom_call.1} parent=1 // pred_check_branch
      %145 = sbr.rel (%p143) target = $region29
    $region28: #{tpu_custom_call.1} parent=1 // pred_region
      %v146 = vld [vmem:[#allocation2] sm:$0xff]
      %147 = vst [vmem:[#allocation8] sm:$0xff] %v146
    $region29: #{tpu_custom_call.1} parent=1 // pred_fallthru
      _
    // Predicated region
    $region30: #{tpu_custom_call.1} parent=1 // pred_check
      _
    $region31: #{tpu_custom_call.1} parent=1 // pred_check_branch
      %149 = sbr.rel (0) target = $region33
    $region32: #{tpu_custom_call.1} parent=1 // pred_region
      %s151 = ssub.s32 128, 128
      %152 = vsyncadd [#allocation5], %s151
      %s154 = sshll.u32 [#allocation8], 4
      %s155 = int_to_ptr.vmem [resolvable:$true] %s154
      %157 = dma.vmem_to_hbm [thread:$0]  %s155, 128, %s3, [#allocation5]
    $region33: #{tpu_custom_call.1} parent=1 // pred_fallthru
      _
    // Predicated region
    $region34: #{tpu_custom_call.1} parent=1 // pred_check
      _
    $region35: #{tpu_custom_call.1} parent=1 // pred_check_branch
      %159 = sbr.rel (0) target = $region37
    $region36: #{tpu_custom_call.1} parent=1 // pred_region
      %160 = dma.done [#allocation5], 128
    $region37: #{tpu_custom_call.1} parent=1 // pred_fallthru
      _
    %161 = vsyncpa [#allocation4], 1
    %162 = vsyncpa [#allocation7], 1
    %163 = vsyncpa [#allocation5], 1

</llo_original>
